<compile_context>
chip_gen: v7x
topology: tpu7x:2x2x1
jax: 0.10.0
libtpu: 0.0.40
codegen_flags: <defaults>
</compile_context>

<pallas_src>
import functools

import jax
import jax.numpy as jnp
from jax.experimental import pallas as pl
from jax.experimental.pallas import tpu as pltpu


def _round_up(x: int, m: int) -> int:
    return (x + m - 1) // m * m


def _qnet_kernel(state_ref, action_ref, w1s_ref, w1a_ref, b1_ref,
                 w2_ref, b2_ref, w3_ref, b3_ref, q_ref):
    # Weights w1s/w1a/w2 are bf16; biases and w3 are f32; accumulate in f32.
    w1s = w1s_ref[...]
    w1a = w1a_ref[...]
    s = state_ref[...].astype(w1s.dtype)
    a = action_ref[...].astype(w1a.dtype)

    # Layer 1: (state | action) @ W1 + b1, with the concat folded into two matmuls.
    h1 = (jnp.dot(s, w1s, preferred_element_type=jnp.float32)
          + jnp.dot(a, w1a, preferred_element_type=jnp.float32)
          + b1_ref[...])
    h1 = jnp.maximum(h1, 0.0)

    # Layer 2: Linear + ReLU (bf16 operands, f32 accumulation).
    h2 = (jnp.dot(h1.astype(w1s.dtype), w2_ref[...],
                  preferred_element_type=jnp.float32) + b2_ref[...])
    h2 = jnp.maximum(h2, 0.0)

    # Layer 3: output width 1 -> VPU multiply + lane reduction (keeps MXU free).
    q = jnp.sum(h2 * w3_ref[...], axis=-1) + b3_ref[0]        # (TILE_B,)
    # Lane-dense store: batch lives on the lane axis of the (1, TILE_B) block.
    q_ref[...] = q[None, :].astype(q_ref.dtype)


@functools.partial(jax.jit, static_argnames=("tile_b",))
def qnetwork_forward(state, action, params, *, tile_b=512):
    """Pallas implementation of QNetwork.forward(state, action) -> (batch, 1)."""
    w1s, w1a, b1, w2, b2, w3, b3 = params
    batch, input_dims = state.shape
    n_actions = action.shape[1]
    fc1 = w1s.shape[1]
    fc2 = w2.shape[1]

    # Batch tile is a multiple of 128 (lane-dense output); pad batch to tiles.
    eff_tile = min(_round_up(tile_b, 128), _round_up(batch, 128))
    padded = _round_up(batch, eff_tile)
    if padded != batch:
        pad = ((0, padded - batch), (0, 0))
        state = jnp.pad(state, pad)
        action = jnp.pad(action, pad)
    grid = (padded // eff_tile,)

    # bf16 operands for the MXU (accumulation stays f32 inside the kernel).
    w1s_c = w1s.astype(jnp.bfloat16)
    w1a_c = w1a.astype(jnp.bfloat16)
    w2_c = w2.astype(jnp.bfloat16)

    flops = 2 * padded * ((input_dims + n_actions) * fc1 + fc1 * fc2 + fc2)
    bytes_accessed = (
        padded * (input_dims + n_actions) * 4          # state/action in (f32)
        + padded * 4                                   # q out (f32)
        + (input_dims + n_actions) * fc1 * 2           # W1 (bf16)
        + fc1 * fc2 * 2                                # W2 (bf16)
        + (fc1 + fc2 + fc2 + 1) * 4                    # b1, b2, w3, b3 (f32)
    )

    batch_block = lambda i: (i, 0)
    resident = lambda i: (0, 0)

    q_row = pl.pallas_call(
        _qnet_kernel,
        out_shape=jax.ShapeDtypeStruct((1, padded), jnp.float32),
        grid=grid,
        in_specs=[
            pl.BlockSpec((eff_tile, input_dims), batch_block),   # state
            pl.BlockSpec((eff_tile, n_actions), batch_block),    # action
            pl.BlockSpec((input_dims, fc1), resident),           # W1_s (bf16)
            pl.BlockSpec((n_actions, fc1), resident),            # W1_a (bf16)
            pl.BlockSpec((1, fc1), resident),                    # b1
            pl.BlockSpec((fc1, fc2), resident),                  # W2 (bf16)
            pl.BlockSpec((1, fc2), resident),                    # b2
            pl.BlockSpec((1, fc2), resident),                    # w3 row
            pl.BlockSpec(memory_space=pltpu.MemorySpace.SMEM),   # b3 scalar
        ],
        out_specs=pl.BlockSpec((1, eff_tile), lambda i: (0, i)),
        compiler_params=pltpu.CompilerParams(
            dimension_semantics=("parallel",)),
        cost_estimate=pl.CostEstimate(
            flops=flops, transcendentals=0, bytes_accessed=bytes_accessed),
    )(state, action, w1s_c, w1a_c, b1, w2_c, b2, w3, b3)

    return q_row[0, :batch][:, None]


def init_params(key, input_dims, n_actions, fc1_dims=256, fc2_dims=256):
    """PyTorch-style uniform(-1/sqrt(fan_in), 1/sqrt(fan_in)) init.

    W1/W2 are stored [in_features, out_features] (transposed vs nn.Linear) and
    W1 is split into its state/action halves; w3 is kept as a (1, fc2) row.
    """
    def linear(k, fan_in, fan_out):
        kw, kb = jax.random.split(k)
        bound = 1.0 / (fan_in ** 0.5)
        w = jax.random.uniform(kw, (fan_in, fan_out), jnp.float32, -bound, bound)
        b = jax.random.uniform(kb, (1, fan_out), jnp.float32, -bound, bound)
        return w, b

    k1, k2, k3 = jax.random.split(key, 3)
    w1, b1 = linear(k1, input_dims + n_actions, fc1_dims)
    w2, b2 = linear(k2, fc1_dims, fc2_dims)
    w3, b3 = linear(k3, fc2_dims, 1)
    w1s, w1a = w1[:input_dims], w1[input_dims:]
    return (w1s, w1a, b1, w2, b2, w3.T, b3.reshape(-1))


def _reference_forward(state, action, params):
    w1s, w1a, b1, w2, b2, w3, b3 = params
    w1 = jnp.concatenate([w1s, w1a], axis=0)
    sa = jnp.concatenate([state, action], axis=-1)
    h1 = jnp.maximum(sa @ w1 + b1, 0.0)
    h2 = jnp.maximum(h1 @ w2 + b2, 0.0)
    return h2 @ w3.T + b3


if __name__ == "__main__":
    input_dims, n_actions, batch = 8, 4, 8

    key = jax.random.PRNGKey(0)
    k_state, k_action, k_params = jax.random.split(key, 3)
    state = jax.random.normal(k_state, (batch, input_dims), jnp.float32)
    action = jax.random.normal(k_action, (batch, n_actions), jnp.float32)
    params = init_params(k_params, input_dims, n_actions)

    q = jax.block_until_ready(qnetwork_forward(state, action, params))
    q_ref = _reference_forward(state, action, params)
    assert q.shape == (batch, 1), q.shape
    # bf16 matmul operands (f32 accumulation) -> loosened tolerance vs f32 ref.
    assert jnp.allclose(q, q_ref, atol=5e-2, rtol=5e-2), (q, q_ref)

    # Multi-tile path (grid > 1, ragged batch handled by padding).
    batch2 = 300
    k2s, k2a = jax.random.split(jax.random.PRNGKey(1))
    state2 = jax.random.normal(k2s, (batch2, input_dims), jnp.float32)
    action2 = jax.random.normal(k2a, (batch2, n_actions), jnp.float32)
    q2 = jax.block_until_ready(
        qnetwork_forward(state2, action2, params, tile_b=128))
    q2_ref = _reference_forward(state2, action2, params)
    assert q2.shape == (batch2, 1), q2.shape
    assert jnp.allclose(q2, q2_ref, atol=5e-2, rtol=5e-2), (q2, q2_ref)

    print("KERNEL_OK")
</pallas_src>

<mosaic_0001>
module attributes {stable_mosaic.version = 11 : i64} {
  func.func @_qnet_kernel(%arg0: i32, %arg1: memref<128x8xf32, #tpu.memory_space<vmem>>, %arg2: memref<128x4xf32, #tpu.memory_space<vmem>>, %arg3: memref<8x256xbf16, #tpu.memory_space<vmem>>, %arg4: memref<4x256xbf16, #tpu.memory_space<vmem>>, %arg5: memref<1x256xf32, #tpu.memory_space<vmem>>, %arg6: memref<256x256xbf16, #tpu.memory_space<vmem>>, %arg7: memref<1x256xf32, #tpu.memory_space<vmem>>, %arg8: memref<1x256xf32, #tpu.memory_space<vmem>>, %arg9: memref<1xf32, #tpu.memory_space<smem>>, %arg10: memref<1x128xf32, #tpu.memory_space<vmem>>) attributes {dimension_semantics = [#tpu.dimension_semantics<parallel>], iteration_bounds = array<i64: 1>, scalar_prefetch = 0 : i64, scratch_operands = 0 : i64, tpu.core_type = #tpu.core_type<tc>, window_params = [{transform_indices = @transform_0, window_bounds = array<i64: 128, 8>}, {transform_indices = @transform_1, window_bounds = array<i64: 128, 4>}, {pipeline_mode = #tpu.pipeline_mode<synchronous>, transform_indices = @transform_2, window_bounds = array<i64: 8, 256>}, {pipeline_mode = #tpu.pipeline_mode<synchronous>, transform_indices = @transform_3, window_bounds = array<i64: 4, 256>}, {pipeline_mode = #tpu.pipeline_mode<synchronous>, transform_indices = @transform_4, window_bounds = array<i64: 1, 256>}, {pipeline_mode = #tpu.pipeline_mode<synchronous>, transform_indices = @transform_5, window_bounds = array<i64: 256, 256>}, {pipeline_mode = #tpu.pipeline_mode<synchronous>, transform_indices = @transform_6, window_bounds = array<i64: 1, 256>}, {pipeline_mode = #tpu.pipeline_mode<synchronous>, transform_indices = @transform_7, window_bounds = array<i64: 1, 256>}, {transform_indices = @transform_8, window_bounds = array<i64: 1>}, {transform_indices = @transform_9, window_bounds = array<i64: 1, 128>}]} {
    %c0 = arith.constant 0 : index
    %c0_0 = arith.constant 0 : index
    %0 = vector.load %arg3[%c0, %c0_0] : memref<8x256xbf16, #tpu.memory_space<vmem>>, vector<8x256xbf16>
    %c0_1 = arith.constant 0 : index
    %c0_2 = arith.constant 0 : index
    %1 = vector.load %arg4[%c0_1, %c0_2] : memref<4x256xbf16, #tpu.memory_space<vmem>>, vector<4x256xbf16>
    %c0_3 = arith.constant 0 : index
    %c0_4 = arith.constant 0 : index
    %2 = vector.load %arg1[%c0_3, %c0_4] : memref<128x8xf32, #tpu.memory_space<vmem>>, vector<128x8xf32>
    %3 = arith.truncf %2 : vector<128x8xf32> to vector<128x8xbf16>
    %c0_5 = arith.constant 0 : index
    %c0_6 = arith.constant 0 : index
    %4 = vector.load %arg2[%c0_5, %c0_6] : memref<128x4xf32, #tpu.memory_space<vmem>>, vector<128x4xf32>
    %5 = arith.truncf %4 : vector<128x4xf32> to vector<128x4xbf16>
    %cst = arith.constant dense<0.000000e+00> : vector<128x256xf32>
    %6 = tpu.matmul %3, %0, %cst {dimension_numbers = #tpu.dot_dimension_numbers<[1], [0], [0], [1], [0, 0, 1, 1], [], []>} : vector<128x8xbf16>, vector<8x256xbf16>, vector<128x256xf32> -> vector<128x256xf32>
    %cst_7 = arith.constant dense<0.000000e+00> : vector<128x256xf32>
    %7 = tpu.matmul %5, %1, %cst_7 {dimension_numbers = #tpu.dot_dimension_numbers<[1], [0], [0], [1], [0, 0, 1, 1], [], []>} : vector<128x4xbf16>, vector<4x256xbf16>, vector<128x256xf32> -> vector<128x256xf32>
    %8 = arith.addf %6, %7 : vector<128x256xf32>
    %c0_8 = arith.constant 0 : index
    %c0_9 = arith.constant 0 : index
    %9 = vector.load %arg5[%c0_8, %c0_9] : memref<1x256xf32, #tpu.memory_space<vmem>>, vector<1x256xf32>
    %10 = vector.broadcast %9 : vector<1x256xf32> to vector<128x256xf32>
    %11 = arith.addf %8, %10 : vector<128x256xf32>
    %cst_10 = arith.constant 0.000000e+00 : f32
    %12 = vector.broadcast %cst_10 : f32 to vector<128x256xf32>
    %13 = arith.maximumf %11, %12 : vector<128x256xf32>
    %14 = arith.truncf %13 : vector<128x256xf32> to vector<128x256xbf16>
    %c0_11 = arith.constant 0 : index
    %c0_12 = arith.constant 0 : index
    %15 = vector.load %arg6[%c0_11, %c0_12] : memref<256x256xbf16, #tpu.memory_space<vmem>>, vector<256x256xbf16>
    %cst_13 = arith.constant dense<0.000000e+00> : vector<128x256xf32>
    %16 = tpu.matmul %14, %15, %cst_13 {dimension_numbers = #tpu.dot_dimension_numbers<[1], [0], [0], [1], [0, 0, 1, 1], [], []>} : vector<128x256xbf16>, vector<256x256xbf16>, vector<128x256xf32> -> vector<128x256xf32>
    %c0_14 = arith.constant 0 : index
    %c0_15 = arith.constant 0 : index
    %17 = vector.load %arg7[%c0_14, %c0_15] : memref<1x256xf32, #tpu.memory_space<vmem>>, vector<1x256xf32>
    %18 = vector.broadcast %17 : vector<1x256xf32> to vector<128x256xf32>
    %19 = arith.addf %16, %18 : vector<128x256xf32>
    %cst_16 = arith.constant 0.000000e+00 : f32
    %20 = vector.broadcast %cst_16 : f32 to vector<128x256xf32>
    %21 = arith.maximumf %19, %20 : vector<128x256xf32>
    %c0_17 = arith.constant 0 : index
    %c0_18 = arith.constant 0 : index
    %22 = vector.load %arg8[%c0_17, %c0_18] : memref<1x256xf32, #tpu.memory_space<vmem>>, vector<1x256xf32>
    %23 = vector.broadcast %22 : vector<1x256xf32> to vector<128x256xf32>
    %24 = arith.mulf %21, %23 : vector<128x256xf32>
    %cst_19 = arith.constant dense<0.000000e+00> : vector<128xf32>
    %25 = vector.multi_reduction <add>, %24, %cst_19 [1] : vector<128x256xf32> to vector<128xf32>
    %c0_20 = arith.constant 0 : index
    %26 = memref.load %arg9[%c0_20] : memref<1xf32, #tpu.memory_space<smem>>
    %27 = vector.broadcast %26 : f32 to vector<128xf32>
    %28 = arith.addf %25, %27 : vector<128xf32>
    %29 = vector.shape_cast %28 : vector<128xf32> to vector<1x128xf32>
    %c0_21 = arith.constant 0 : index
    %c0_22 = arith.constant 0 : index
    %30 = vector.load %arg10[%c0_21, %c0_22] : memref<1x128xf32, #tpu.memory_space<vmem>>, vector<1x128xf32>
    tpu.vector_store %arg10[%c0_21, %c0_22], %29 {strides = array<i32>} : memref<1x128xf32, #tpu.memory_space<vmem>>, vector<1x128xf32>,
    return
  }
  func.func @transform_0(%arg0: i32) -> (i32, i32) {
    %c0_i32 = arith.constant 0 : i32
    %c0_i32_0 = arith.constant 0 : i32
    return %arg0, %c0_i32 : i32, i32
  }
  func.func @transform_1(%arg0: i32) -> (i32, i32) {
    %c0_i32 = arith.constant 0 : i32
    %c0_i32_0 = arith.constant 0 : i32
    return %arg0, %c0_i32 : i32, i32
  }
  func.func @transform_2(%arg0: i32) -> (i32, i32) {
    %c0_i32 = arith.constant 0 : i32
    %c0_i32_0 = arith.constant 0 : i32
    %c0_i32_1 = arith.constant 0 : i32
    return %c0_i32, %c0_i32_0 : i32, i32
  }
  func.func @transform_3(%arg0: i32) -> (i32, i32) {
    %c0_i32 = arith.constant 0 : i32
    %c0_i32_0 = arith.constant 0 : i32
    %c0_i32_1 = arith.constant 0 : i32
    return %c0_i32, %c0_i32_0 : i32, i32
  }
  func.func @transform_4(%arg0: i32) -> (i32, i32) {
    %c0_i32 = arith.constant 0 : i32
    %c0_i32_0 = arith.constant 0 : i32
    %c0_i32_1 = arith.constant 0 : i32
    return %c0_i32, %c0_i32_0 : i32, i32
  }
  func.func @transform_5(%arg0: i32) -> (i32, i32) {
    %c0_i32 = arith.constant 0 : i32
    %c0_i32_0 = arith.constant 0 : i32
    %c0_i32_1 = arith.constant 0 : i32
    return %c0_i32, %c0_i32_0 : i32, i32
  }
  func.func @transform_6(%arg0: i32) -> (i32, i32) {
    %c0_i32 = arith.constant 0 : i32
    %c0_i32_0 = arith.constant 0 : i32
    %c0_i32_1 = arith.constant 0 : i32
    return %c0_i32, %c0_i32_0 : i32, i32
  }
  func.func @transform_7(%arg0: i32) -> (i32, i32) {
    %c0_i32 = arith.constant 0 : i32
    %c0_i32_0 = arith.constant 0 : i32
    %c0_i32_1 = arith.constant 0 : i32
    return %c0_i32, %c0_i32_0 : i32, i32
  }
  func.func @transform_8(%arg0: i32) -> i32 {
    %c0_i32 = arith.constant 0 : i32
    %c0_i32_0 = arith.constant 0 : i32
    return %c0_i32 : i32
  }
  func.func @transform_9(%arg0: i32) -> (i32, i32) {
    %c0_i32 = arith.constant 0 : i32
    %c0_i32_0 = arith.constant 0 : i32
    return %c0_i32, %arg0 : i32, i32
  }
}

</mosaic_0001>

<llo_original>
// kernel: qnetwork_forward.1
$region0: #{qnetwork_forward.1}
  #allocation0 [shape = 'u32[]', space=smem, size = 0x4, offset = 0x4, fixed_abs, tag = 'smem constant byte address 0x4 - core index']
  #allocation1 [shape = 'u32[144,128]{1,0:T(1,128)}', space=vmem, size = 0x12000, scoped, tag = 'internal scratch']
  #allocation2 [shape = 'f32[1]{0:T(128)S(6)}', space=smem, size = 0x200, scoped, tag = 'scoped memory for qnetwork_forward.1']
  %s0 = inlined_call_operand.vmem [shape: f32[128,8], index: 0, kind: input, shape index: {}]
  %s1 = inlined_call_operand.vmem [shape: f32[128,4], index: 1, kind: input, shape index: {}]
  %s2 = inlined_call_operand.vmem [shape: bf16[8,256], index: 2, kind: input, shape index: {}]
  %s3 = inlined_call_operand.vmem [shape: bf16[4,256], index: 3, kind: input, shape index: {}]
  %s4 = inlined_call_operand.vmem [shape: f32[1,256], index: 4, kind: input, shape index: {}]
  %s5 = inlined_call_operand.vmem [shape: bf16[256,256], index: 5, kind: input, shape index: {}]
  %s6 = inlined_call_operand.vmem [shape: f32[1,256], index: 6, kind: input, shape index: {}]
  %s7 = inlined_call_operand.vmem [shape: f32[1,256], index: 7, kind: input, shape index: {}]
  %s8 = inlined_call_operand.<no memory space> [shape: f32[1], index: 8, kind: input, shape index: {}]
  %s9 = inlined_call_operand.vmem [shape: f32[1,128], index: 9, kind: output, shape index: {}]
  %s10 = sld [smem:[#allocation0]]
  $region46: #{qnetwork_forward.1} parent=0
    _
  %s12 = ssub.s32 1, %s10
  %s13 = scalar_select 0, %s12, %s10
  %14 = sst [smem:[#allocation2]] %s8
  // Predicated region
  $region2: #{qnetwork_forward.1} parent=0 // pred_check
    _
  $region3: #{qnetwork_forward.1} parent=0 // pred_check_branch
    %16 = sbr.rel (0) target = $region5
  $region4: #{qnetwork_forward.1} parent=0 // pred_region
    _
  $region5: #{qnetwork_forward.1} parent=0 // pred_fallthru
    _
  // Predicated region
  $region6: #{qnetwork_forward.1} parent=0 // pred_check
    _
  $region7: #{qnetwork_forward.1} parent=0 // pred_check_branch
    %18 = sbr.rel (0) target = $region9
  $region8: #{qnetwork_forward.1} parent=0 // pred_region
    _
  $region9: #{qnetwork_forward.1} parent=0 // pred_fallthru
    _
  // Predicated region
  $region10: #{qnetwork_forward.1} parent=0 // pred_check
    _
  $region11: #{qnetwork_forward.1} parent=0 // pred_check_branch
    %20 = sbr.rel (0) target = $region13
  $region12: #{qnetwork_forward.1} parent=0 // pred_region
    _
  $region13: #{qnetwork_forward.1} parent=0 // pred_fallthru
    _
  // Predicated region
  $region14: #{qnetwork_forward.1} parent=0 // pred_check
    _
  $region15: #{qnetwork_forward.1} parent=0 // pred_check_branch
    %22 = sbr.rel (0) target = $region17
  $region16: #{qnetwork_forward.1} parent=0 // pred_region
    _
  $region17: #{qnetwork_forward.1} parent=0 // pred_fallthru
    _
  // Predicated region
  $region18: #{qnetwork_forward.1} parent=0 // pred_check
    _
  $region19: #{qnetwork_forward.1} parent=0 // pred_check_branch
    %24 = sbr.rel (0) target = $region21
  $region20: #{qnetwork_forward.1} parent=0 // pred_region
    _
  $region21: #{qnetwork_forward.1} parent=0 // pred_fallthru
    _
  // Predicated region
  $region22: #{qnetwork_forward.1} parent=0 // pred_check
    _
  $region23: #{qnetwork_forward.1} parent=0 // pred_check_branch
    %26 = sbr.rel (0) target = $region25
  $region24: #{qnetwork_forward.1} parent=0 // pred_region
    _
  $region25: #{qnetwork_forward.1} parent=0 // pred_fallthru
    _
  // Predicated region
  $region26: #{qnetwork_forward.1} parent=0 // pred_check
    _
  $region27: #{qnetwork_forward.1} parent=0 // pred_check_branch
    %28 = sbr.rel (0) target = $region29
  $region28: #{qnetwork_forward.1} parent=0 // pred_region
    _
  $region29: #{qnetwork_forward.1} parent=0 // pred_fallthru
    _
  // Predicated region
  $region30: #{qnetwork_forward.1} parent=0 // pred_check
    _
  $region31: #{qnetwork_forward.1} parent=0 // pred_check_branch
    %30 = sbr.rel (0) target = $region33
  $region32: #{qnetwork_forward.1} parent=0 // pred_region
    _
  $region33: #{qnetwork_forward.1} parent=0 // pred_fallthru
    _
  // Predicated region
  $region34: #{qnetwork_forward.1} parent=0 // pred_check
    _
  $region35: #{qnetwork_forward.1} parent=0 // pred_check_branch
    %32 = sbr.rel (0) target = $region37
  $region36: #{qnetwork_forward.1} parent=0 // pred_region
    _
  $region37: #{qnetwork_forward.1} parent=0 // pred_fallthru
    _
  %v34 = vld [vmem:[%s2] sm:$0xff]
  %v35 = vld [vmem:[%s3] sm:$0xf]
  %v36 = vld [vmem:[%s0] sm:$0xff]
  %v37 = vld [vmem:[%s0 + $0x8] sm:$0xff]
  %v38 = vld [vmem:[%s0 + $0x10] sm:$0xff]
  %v39 = vld [vmem:[%s0 + $0x18] sm:$0xff]
  %v40 = vld [vmem:[%s0 + $0x20] sm:$0xff]
  %v41 = vld [vmem:[%s0 + $0x28] sm:$0xff]
  %v42 = vld [vmem:[%s0 + $0x30] sm:$0xff]
  %v43 = vld [vmem:[%s0 + $0x38] sm:$0xff]
  %v44 = vld [vmem:[%s0 + $0x40] sm:$0xff]
  %v45 = vld [vmem:[%s0 + $0x48] sm:$0xff]
  %v46 = vld [vmem:[%s0 + $0x50] sm:$0xff]
  %v47 = vld [vmem:[%s0 + $0x58] sm:$0xff]
  %v48 = vld [vmem:[%s0 + $0x60] sm:$0xff]
  %v49 = vld [vmem:[%s0 + $0x68] sm:$0xff]
  %v50 = vld [vmem:[%s0 + $0x70] sm:$0xff]
  %v51 = vld [vmem:[%s0 + $0x78] sm:$0xff]
  %v52 = vpack.c.bf16 %v37, %v36
  %v53 = vpack.c.bf16 %v39, %v38
  %v54 = vpack.c.bf16 %v41, %v40
  %v55 = vpack.c.bf16 %v43, %v42
  %v56 = vpack.c.bf16 %v45, %v44
  %v57 = vpack.c.bf16 %v47, %v46
  %v58 = vpack.c.bf16 %v49, %v48
  %v59 = vpack.c.bf16 %v51, %v50
  %v60 = vld [vmem:[%s1] sm:$0xff]
  %v61 = vld [vmem:[%s1 + $0x8] sm:$0xff]
  %v62 = vld [vmem:[%s1 + $0x10] sm:$0xff]
  %v63 = vld [vmem:[%s1 + $0x18] sm:$0xff]
  %v64 = vld [vmem:[%s1 + $0x20] sm:$0xff]
  %v65 = vld [vmem:[%s1 + $0x28] sm:$0xff]
  %v66 = vld [vmem:[%s1 + $0x30] sm:$0xff]
  %v67 = vld [vmem:[%s1 + $0x38] sm:$0xff]
  %v68 = vld [vmem:[%s1 + $0x40] sm:$0xff]
  %v69 = vld [vmem:[%s1 + $0x48] sm:$0xff]
  %v70 = vld [vmem:[%s1 + $0x50] sm:$0xff]
  %v71 = vld [vmem:[%s1 + $0x58] sm:$0xff]
  %v72 = vld [vmem:[%s1 + $0x60] sm:$0xff]
  %v73 = vld [vmem:[%s1 + $0x68] sm:$0xff]
  %v74 = vld [vmem:[%s1 + $0x70] sm:$0xff]
  %v75 = vld [vmem:[%s1 + $0x78] sm:$0xff]
  %v76 = vpack.c.bf16 %v61, %v60
  %v77 = vpack.c.bf16 %v63, %v62
  %v78 = vpack.c.bf16 %v65, %v64
  %v79 = vpack.c.bf16 %v67, %v66
  %v80 = vpack.c.bf16 %v69, %v68
  %v81 = vpack.c.bf16 %v71, %v70
  %v82 = vpack.c.bf16 %v73, %v72
  %v83 = vpack.c.bf16 %v75, %v74
  %v86 = vunpack.c.l.s4 1983009808
  %v87 = vunpack.c.0.s8 %v86
  %v88 = vlaneseq
  %v89 = vshrl.u32 %v88, 7
  %v90 = vsub.s32 %v87, %v89
  %v91 = vrot.slane %v35, %v90
  %v92 = vcombine.high %v91, %v91
  %vm93 = vcmask 31744
  %v95 = vsel %vm93, %v76, 0
  %v98 = vsel %vm93, %v77, 0
  %v101 = vsel %vm93, %v78, 0
  %v104 = vsel %vm93, %v79, 0
  %v107 = vsel %vm93, %v80, 0
  %v110 = vsel %vm93, %v81, 0
  %v113 = vsel %vm93, %v82, 0
  %v116 = vsel %vm93, %v83, 0
  %vm118 = vcmask 1041408
  %v120 = vsel %vm118, %v91, 0
  %v123 = vsel %vm118, %v92, 0
  %125 = vmatprep.subr.bf16.mxu0 %v123
  %126 = vmatpush1.bf16.msra.mxu0 %v120
  %127 = vmatprep.subr.bf16.mxu0 0
  %128 = vmatpush1.bf16.msra.mxu0 0
  %129 = vmatprep.subr.bf16.mxu0 0
  %130 = vmatpush1.bf16.msra.mxu0 0
  %131 = vmatprep.subr.bf16.mxu0 0
  %132 = vmatpush1.bf16.msra.mxu0 0
  %133 = vmatprep.subr.bf16.mxu0 0
  %134 = vmatpush1.bf16.msra.mxu0 0
  %135 = vmatprep.subr.bf16.mxu0 0
  %136 = vmatpush1.bf16.msra.mxu0 0
  %137 = vmatprep.subr.bf16.mxu0 0
  %138 = vmatpush1.bf16.msra.mxu0 0
  %139 = vmatprep.subr.bf16.mxu0 0
  %140 = vmatpush1.bf16.msra.mxu0 0
  %141 = vmatprep.subr.bf16.mxu0 0
  %142 = vmatpush1.bf16.msra.mxu0 0
  %143 = vmatprep.subr.bf16.mxu0 0
  %144 = vmatpush1.bf16.msra.mxu0 0
  %145 = vmatprep.subr.bf16.mxu0 0
  %146 = vmatpush1.bf16.msra.mxu0 0
  %147 = vmatprep.subr.bf16.mxu0 0
  %148 = vmatpush1.bf16.msra.mxu0 0
  %149 = vmatprep.subr.bf16.mxu0 0
  %150 = vmatpush1.bf16.msra.mxu0 0
  %151 = vmatprep.subr.bf16.mxu0 0
  %152 = vmatpush1.bf16.msra.mxu0 0
  %153 = vmatprep.subr.bf16.mxu0 0
  %154 = vmatpush1.bf16.msra.mxu0 0
  %155 = vmatprep.subr.bf16.mxu0 0
  %156 = vmatpush1.bf16.msra.mxu0 0
  %157 = vmatprep.mubr.bf16.mxu0 0
  %158 = vmatmul.mubr.bf16.gmra.mrb[0].mxu0 %v95
  %v159 = vpop.f32.mrb[0].mxu0
  %v160 = vadd.f32 0.0, %v159
  %v161 = vpop.f32.mrb[0].mxu0
  %v162 = vadd.f32 0.0, %v161
  %v163 = vpop.f32.mrb[0].mxu0
  %v164 = vadd.f32 0.0, %v163
  %v165 = vpop.f32.mrb[0].mxu0
  %v166 = vadd.f32 0.0, %v165
  %167 = vmatprep.mubr.bf16.mxu0 0
  %168 = vmatmul.mubr.bf16.gmra.mrb[0].mxu0 %v98
  %v169 = vpop.f32.mrb[0].mxu0
  %v170 = vadd.f32 0.0, %v169
  %v171 = vpop.f32.mrb[0].mxu0
  %v172 = vadd.f32 0.0, %v171
  %v173 = vpop.f32.mrb[0].mxu0
  %v174 = vadd.f32 0.0, %v173
  %v175 = vpop.f32.mrb[0].mxu0
  %v176 = vadd.f32 0.0, %v175
  %177 = vmatprep.mubr.bf16.mxu0 0
  %178 = vmatmul.mubr.bf16.gmra.mrb[0].mxu0 %v101
  %v179 = vpop.f32.mrb[0].mxu0
  %v180 = vadd.f32 0.0, %v179
  %v181 = vpop.f32.mrb[0].mxu0
  %v182 = vadd.f32 0.0, %v181
  %v183 = vpop.f32.mrb[0].mxu0
  %v184 = vadd.f32 0.0, %v183
  %v185 = vpop.f32.mrb[0].mxu0
  %v186 = vadd.f32 0.0, %v185
  %187 = vmatprep.mubr.bf16.mxu0 0
  %188 = vmatmul.mubr.bf16.gmra.mrb[0].mxu0 %v104
  %v189 = vpop.f32.mrb[0].mxu0
  %v190 = vadd.f32 0.0, %v189
  %v191 = vpop.f32.mrb[0].mxu0
  %v192 = vadd.f32 0.0, %v191
  %v193 = vpop.f32.mrb[0].mxu0
  %v194 = vadd.f32 0.0, %v193
  %v195 = vpop.f32.mrb[0].mxu0
  %v196 = vadd.f32 0.0, %v195
  %197 = vmatprep.mubr.bf16.mxu0 0
  %198 = vmatmul.mubr.bf16.gmra.mrb[0].mxu0 %v107
  %v199 = vpop.f32.mrb[0].mxu0
  %v200 = vadd.f32 0.0, %v199
  %v201 = vpop.f32.mrb[0].mxu0
  %v202 = vadd.f32 0.0, %v201
  %v203 = vpop.f32.mrb[0].mxu0
  %v204 = vadd.f32 0.0, %v203
  %v205 = vpop.f32.mrb[0].mxu0
  %v206 = vadd.f32 0.0, %v205
  %207 = vmatprep.mubr.bf16.mxu0 0
  %208 = vmatmul.mubr.bf16.gmra.mrb[0].mxu0 %v110
  %v209 = vpop.f32.mrb[0].mxu0
  %v210 = vadd.f32 0.0, %v209
  %v211 = vpop.f32.mrb[0].mxu0
  %v212 = vadd.f32 0.0, %v211
  %v213 = vpop.f32.mrb[0].mxu0
  %v214 = vadd.f32 0.0, %v213
  %v215 = vpop.f32.mrb[0].mxu0
  %v216 = vadd.f32 0.0, %v215
  %217 = vmatprep.mubr.bf16.mxu0 0
  %218 = vmatmul.mubr.bf16.gmra.mrb[0].mxu0 %v113
  %v219 = vpop.f32.mrb[0].mxu0
  %v220 = vadd.f32 0.0, %v219
  %v221 = vpop.f32.mrb[0].mxu0
  %v222 = vadd.f32 0.0, %v221
  %v223 = vpop.f32.mrb[0].mxu0
  %v224 = vadd.f32 0.0, %v223
  %v225 = vpop.f32.mrb[0].mxu0
  %v226 = vadd.f32 0.0, %v225
  %227 = vmatprep.mubr.bf16.mxu0 0
  %228 = vmatmul.mubr.bf16.gmra.mrb[0].mxu0 %v116
  %v229 = vpop.f32.mrb[0].mxu0
  %v230 = vadd.f32 0.0, %v229
  %v231 = vpop.f32.mrb[0].mxu0
  %v232 = vadd.f32 0.0, %v231
  %v233 = vpop.f32.mrb[0].mxu0
  %v234 = vadd.f32 0.0, %v233
  %v235 = vpop.f32.mrb[0].mxu0
  %v236 = vadd.f32 0.0, %v235
  %237 = vdwg.mxu0
  %v239 = vunpack.c.l.b16 %v34
  %v240 = vunpack.c.h.b16 %v34
  %v241 = vpack.c.b16 %v239, %v239
  %v242 = vpack.c.b16 %v240, %v240
  %vm243 = vcmask 64512
  %v245 = vsel %vm243, %v52, 0
  %v248 = vsel %vm243, %v53, 0
  %v251 = vsel %vm243, %v54, 0
  %v254 = vsel %vm243, %v55, 0
  %v257 = vsel %vm243, %v56, 0
  %v260 = vsel %vm243, %v57, 0
  %v263 = vsel %vm243, %v58, 0
  %v266 = vsel %vm243, %v59, 0
  %vm268 = vcmask 1043456
  %v270 = vsel %vm268, %v241, 0
  %v273 = vsel %vm268, %v242, 0
  %275 = vmatprep.subr.bf16.mxu0 %v273
  %276 = vmatpush1.bf16.msra.mxu0 %v270
  %277 = vmatprep.subr.bf16.mxu0 0
  %278 = vmatpush1.bf16.msra.mxu0 0
  %279 = vmatprep.subr.bf16.mxu0 0
  %280 = vmatpush1.bf16.msra.mxu0 0
  %281 = vmatprep.subr.bf16.mxu0 0
  %282 = vmatpush1.bf16.msra.mxu0 0
  %283 = vmatprep.subr.bf16.mxu0 0
  %284 = vmatpush1.bf16.msra.mxu0 0
  %285 = vmatprep.subr.bf16.mxu0 0
  %286 = vmatpush1.bf16.msra.mxu0 0
  %287 = vmatprep.subr.bf16.mxu0 0
  %288 = vmatpush1.bf16.msra.mxu0 0
  %289 = vmatprep.subr.bf16.mxu0 0
  %290 = vmatpush1.bf16.msra.mxu0 0
  %291 = vmatprep.subr.bf16.mxu0 0
  %292 = vmatpush1.bf16.msra.mxu0 0
  %293 = vmatprep.subr.bf16.mxu0 0
  %294 = vmatpush1.bf16.msra.mxu0 0
  %295 = vmatprep.subr.bf16.mxu0 0
  %296 = vmatpush1.bf16.msra.mxu0 0
  %297 = vmatprep.subr.bf16.mxu0 0
  %298 = vmatpush1.bf16.msra.mxu0 0
  %299 = vmatprep.subr.bf16.mxu0 0
  %300 = vmatpush1.bf16.msra.mxu0 0
  %301 = vmatprep.subr.bf16.mxu0 0
  %302 = vmatpush1.bf16.msra.mxu0 0
  %303 = vmatprep.subr.bf16.mxu0 0
  %304 = vmatpush1.bf16.msra.mxu0 0
  %305 = vmatprep.subr.bf16.mxu0 0
  %306 = vmatpush1.bf16.msra.mxu0 0
  %307 = vmatprep.mubr.bf16.mxu0 0
  %308 = vmatmul.mubr.bf16.gmra.mrb[0].mxu0 %v245
  %v309 = vpop.f32.mrb[0].mxu0
  %v310 = vadd.f32 %v160, %v309
  %v311 = vpop.f32.mrb[0].mxu0
  %v312 = vadd.f32 %v162, %v311
  %v313 = vpop.f32.mrb[0].mxu0
  %v314 = vadd.f32 %v164, %v313
  %v315 = vpop.f32.mrb[0].mxu0
  %v316 = vadd.f32 %v166, %v315
  %317 = vmatprep.mubr.bf16.mxu0 0
  %318 = vmatmul.mubr.bf16.gmra.mrb[0].mxu0 %v248
  %v319 = vpop.f32.mrb[0].mxu0
  %v320 = vadd.f32 %v170, %v319
  %v321 = vpop.f32.mrb[0].mxu0
  %v322 = vadd.f32 %v172, %v321
  %v323 = vpop.f32.mrb[0].mxu0
  %v324 = vadd.f32 %v174, %v323
  %v325 = vpop.f32.mrb[0].mxu0
  %v326 = vadd.f32 %v176, %v325
  %327 = vmatprep.mubr.bf16.mxu0 0
  %328 = vmatmul.mubr.bf16.gmra.mrb[0].mxu0 %v251
  %v329 = vpop.f32.mrb[0].mxu0
  %v330 = vadd.f32 %v180, %v329
  %v331 = vpop.f32.mrb[0].mxu0
  %v332 = vadd.f32 %v182, %v331
  %v333 = vpop.f32.mrb[0].mxu0
  %v334 = vadd.f32 %v184, %v333
  %v335 = vpop.f32.mrb[0].mxu0
  %v336 = vadd.f32 %v186, %v335
  %337 = vmatprep.mubr.bf16.mxu0 0
  %338 = vmatmul.mubr.bf16.gmra.mrb[0].mxu0 %v254
  %v339 = vpop.f32.mrb[0].mxu0
  %v340 = vadd.f32 %v190, %v339
  %v341 = vpop.f32.mrb[0].mxu0
  %v342 = vadd.f32 %v192, %v341
  %v343 = vpop.f32.mrb[0].mxu0
  %v344 = vadd.f32 %v194, %v343
  %v345 = vpop.f32.mrb[0].mxu0
  %v346 = vadd.f32 %v196, %v345
  %347 = vmatprep.mubr.bf16.mxu0 0
  %348 = vmatmul.mubr.bf16.gmra.mrb[0].mxu0 %v257
  %v349 = vpop.f32.mrb[0].mxu0
  %v350 = vadd.f32 %v200, %v349
  %v351 = vpop.f32.mrb[0].mxu0
  %v352 = vadd.f32 %v202, %v351
  %v353 = vpop.f32.mrb[0].mxu0
  %v354 = vadd.f32 %v204, %v353
  %v355 = vpop.f32.mrb[0].mxu0
  %v356 = vadd.f32 %v206, %v355
  %357 = vmatprep.mubr.bf16.mxu0 0
  %358 = vmatmul.mubr.bf16.gmra.mrb[0].mxu0 %v260
  %v359 = vpop.f32.mrb[0].mxu0
  %v360 = vadd.f32 %v210, %v359
  %v361 = vpop.f32.mrb[0].mxu0
  %v362 = vadd.f32 %v212, %v361
  %v363 = vpop.f32.mrb[0].mxu0
  %v364 = vadd.f32 %v214, %v363
  %v365 = vpop.f32.mrb[0].mxu0
  %v366 = vadd.f32 %v216, %v365
  %367 = vmatprep.mubr.bf16.mxu0 0
  %368 = vmatmul.mubr.bf16.gmra.mrb[0].mxu0 %v263
  %v369 = vpop.f32.mrb[0].mxu0
  %v370 = vadd.f32 %v220, %v369
  %v371 = vpop.f32.mrb[0].mxu0
  %v372 = vadd.f32 %v222, %v371
  %v373 = vpop.f32.mrb[0].mxu0
  %v374 = vadd.f32 %v224, %v373
  %v375 = vpop.f32.mrb[0].mxu0
  %v376 = vadd.f32 %v226, %v375
  %377 = vmatprep.mubr.bf16.mxu0 0
  %378 = vmatmul.mubr.bf16.gmra.mrb[0].mxu0 %v266
  %v379 = vpop.f32.mrb[0].mxu0
  %v380 = vadd.f32 %v230, %v379
  %v381 = vpop.f32.mrb[0].mxu0
  %v382 = vadd.f32 %v232, %v381
  %v383 = vpop.f32.mrb[0].mxu0
  %v384 = vadd.f32 %v234, %v383
  %v385 = vpop.f32.mrb[0].mxu0
  %v386 = vadd.f32 %v236, %v385
  %387 = vdwg.mxu0
  %v388 = vld [vmem:[%s4] sm:$0x3]
  %v390 = vlaneseq
  %v391 = vshrl.u32 %v390, 7
  %v392 = vsub.s32 0, %v391
  %v393 = vrot.slane %v388, %v392
  %v394 = vlaneseq
  %v395 = vshrl.u32 %v394, 7
  %v396 = vsub.s32 1, %v395
  %v397 = vrot.slane %v388, %v396
  %v400 = vadd.f32 %v310, %v393
  %v401 = vadd.f32 %v312, %v397
  %v402 = vadd.f32 %v314, %v393
  %v403 = vadd.f32 %v316, %v397
  %v404 = vadd.f32 %v320, %v393
  %v405 = vadd.f32 %v322, %v397
  %v406 = vadd.f32 %v324, %v393
  %v407 = vadd.f32 %v326, %v397
  %v408 = vadd.f32 %v330, %v393
  %v409 = vadd.f32 %v332, %v397
  %v410 = vadd.f32 %v334, %v393
  %v411 = vadd.f32 %v336, %v397
  %v412 = vadd.f32 %v340, %v393
  %v413 = vadd.f32 %v342, %v397
  %v414 = vadd.f32 %v344, %v393
  %v415 = vadd.f32 %v346, %v397
  %v416 = vadd.f32 %v350, %v393
  %v417 = vadd.f32 %v352, %v397
  %v418 = vadd.f32 %v354, %v393
  %v419 = vadd.f32 %v356, %v397
  %v420 = vadd.f32 %v360, %v393
  %v421 = vadd.f32 %v362, %v397
  %v422 = vadd.f32 %v364, %v393
  %v423 = vadd.f32 %v366, %v397
  %v424 = vadd.f32 %v370, %v393
  %v425 = vadd.f32 %v372, %v397
  %v426 = vadd.f32 %v374, %v393
  %v427 = vadd.f32 %v376, %v397
  %v428 = vadd.f32 %v380, %v393
  %v429 = vadd.f32 %v382, %v397
  %v430 = vadd.f32 %v384, %v393
  %v431 = vadd.f32 %v386, %v397
  %v432 = vmax.f32 %v400, 0.0
  %v433 = vmax.f32 %v401, 0.0
  %v434 = vmax.f32 %v402, 0.0
  %v435 = vmax.f32 %v403, 0.0
  %v436 = vmax.f32 %v404, 0.0
  %v437 = vmax.f32 %v405, 0.0
  %v438 = vmax.f32 %v406, 0.0
  %v439 = vmax.f32 %v407, 0.0
  %v440 = vmax.f32 %v408, 0.0
  %v441 = vmax.f32 %v409, 0.0
  %v442 = vmax.f32 %v410, 0.0
  %v443 = vmax.f32 %v411, 0.0
  %v444 = vmax.f32 %v412, 0.0
  %v445 = vmax.f32 %v413, 0.0
  %v446 = vmax.f32 %v414, 0.0
  %v447 = vmax.f32 %v415, 0.0
  %v448 = vmax.f32 %v416, 0.0
  %v449 = vmax.f32 %v417, 0.0
  %v450 = vmax.f32 %v418, 0.0
  %v451 = vmax.f32 %v419, 0.0
  %v452 = vmax.f32 %v420, 0.0
  %v453 = vmax.f32 %v421, 0.0
  %v454 = vmax.f32 %v422, 0.0
  %v455 = vmax.f32 %v423, 0.0
  %v456 = vmax.f32 %v424, 0.0
  %v457 = vmax.f32 %v425, 0.0
  %v458 = vmax.f32 %v426, 0.0
  %v459 = vmax.f32 %v427, 0.0
  %v460 = vmax.f32 %v428, 0.0
  %v461 = vmax.f32 %v429, 0.0
  %v462 = vmax.f32 %v430, 0.0
  %v463 = vmax.f32 %v431, 0.0
  %v464 = vpack.c.bf16 %v434, %v432
  %v465 = vpack.c.bf16 %v435, %v433
  %v466 = vpack.c.bf16 %v438, %v436
  %v467 = vpack.c.bf16 %v439, %v437
  %v468 = vpack.c.bf16 %v442, %v440
  %v469 = vpack.c.bf16 %v443, %v441
  %v470 = vpack.c.bf16 %v446, %v444
  %v471 = vpack.c.bf16 %v447, %v445
  %v472 = vpack.c.bf16 %v450, %v448
  %v473 = vpack.c.bf16 %v451, %v449
  %v474 = vpack.c.bf16 %v454, %v452
  %v475 = vpack.c.bf16 %v455, %v453
  %v476 = vpack.c.bf16 %v458, %v456
  %v477 = vpack.c.bf16 %v459, %v457
  %v478 = vpack.c.bf16 %v462, %v460
  %v479 = vpack.c.bf16 %v463, %v461
  %v480 = vld [vmem:[%s5] sm:$0xff]
  %v481 = vld [vmem:[%s5 + $0x8] sm:$0xff]
  %v482 = vld [vmem:[%s5 + $0x10] sm:$0xff]
  %v483 = vld [vmem:[%s5 + $0x18] sm:$0xff]
  %v484 = vld [vmem:[%s5 + $0x20] sm:$0xff]
  %v485 = vld [vmem:[%s5 + $0x28] sm:$0xff]
  %v486 = vld [vmem:[%s5 + $0x30] sm:$0xff]
  %v487 = vld [vmem:[%s5 + $0x38] sm:$0xff]
  %v488 = vld [vmem:[%s5 + $0x40] sm:$0xff]
  %v489 = vld [vmem:[%s5 + $0x48] sm:$0xff]
  %v490 = vld [vmem:[%s5 + $0x50] sm:$0xff]
  %v491 = vld [vmem:[%s5 + $0x58] sm:$0xff]
  %v492 = vld [vmem:[%s5 + $0x60] sm:$0xff]
  %v493 = vld [vmem:[%s5 + $0x68] sm:$0xff]
  %v494 = vld [vmem:[%s5 + $0x70] sm:$0xff]
  %v495 = vld [vmem:[%s5 + $0x78] sm:$0xff]
  %v496 = vld [vmem:[%s5 + $0x80] sm:$0xff]
  %v497 = vld [vmem:[%s5 + $0x88] sm:$0xff]
  %v498 = vld [vmem:[%s5 + $0x90] sm:$0xff]
  %v499 = vld [vmem:[%s5 + $0x98] sm:$0xff]
  %v500 = vld [vmem:[%s5 + $0xa0] sm:$0xff]
  %v501 = vld [vmem:[%s5 + $0xa8] sm:$0xff]
  %v502 = vld [vmem:[%s5 + $0xb0] sm:$0xff]
  %v503 = vld [vmem:[%s5 + $0xb8] sm:$0xff]
  %v504 = vld [vmem:[%s5 + $0xc0] sm:$0xff]
  %v505 = vld [vmem:[%s5 + $0xc8] sm:$0xff]
  %v506 = vld [vmem:[%s5 + $0xd0] sm:$0xff]
  %v507 = vld [vmem:[%s5 + $0xd8] sm:$0xff]
  %v508 = vld [vmem:[%s5 + $0xe0] sm:$0xff]
  %v509 = vld [vmem:[%s5 + $0xe8] sm:$0xff]
  %v510 = vld [vmem:[%s5 + $0xf0] sm:$0xff]
  %v511 = vld [vmem:[%s5 + $0xf8] sm:$0xff]
  %v512 = vld [vmem:[%s6] sm:$0x3]
  %v514 = vlaneseq
  %v515 = vshrl.u32 %v514, 7
  %v516 = vsub.s32 0, %v515
  %v517 = vrot.slane %v512, %v516
  %v518 = vlaneseq
  %v519 = vshrl.u32 %v518, 7
  %v520 = vsub.s32 1, %v519
  %v521 = vrot.slane %v512, %v520
  %v556 = vunpack.c.l.b16 %v480
  %v557 = vunpack.c.h.b16 %v480
  %v558 = vunpack.c.l.b16 %v481
  %v559 = vunpack.c.h.b16 %v481
  %v560 = vunpack.c.l.b16 %v482
  %v561 = vunpack.c.h.b16 %v482
  %v562 = vunpack.c.l.b16 %v483
  %v563 = vunpack.c.h.b16 %v483
  %v564 = vunpack.c.l.b16 %v484
  %v565 = vunpack.c.h.b16 %v484
  %v566 = vunpack.c.l.b16 %v485
  %v567 = vunpack.c.h.b16 %v485
  %v568 = vunpack.c.l.b16 %v486
  %v569 = vunpack.c.h.b16 %v486
  %v570 = vunpack.c.l.b16 %v487
  %v571 = vunpack.c.h.b16 %v487
  %v572 = vunpack.c.l.b16 %v488
  %v573 = vunpack.c.h.b16 %v488
  %v574 = vunpack.c.l.b16 %v489
  %v575 = vunpack.c.h.b16 %v489
  %v576 = vunpack.c.l.b16 %v490
  %v577 = vunpack.c.h.b16 %v490
  %v578 = vunpack.c.l.b16 %v491
  %v579 = vunpack.c.h.b16 %v491
  %v580 = vunpack.c.l.b16 %v492
  %v581 = vunpack.c.h.b16 %v492
  %v582 = vunpack.c.l.b16 %v493
  %v583 = vunpack.c.h.b16 %v493
  %v584 = vunpack.c.l.b16 %v494
  %v585 = vunpack.c.h.b16 %v494
  %v586 = vunpack.c.l.b16 %v495
  %v587 = vunpack.c.h.b16 %v495
  %v588 = vunpack.c.l.b16 %v496
  %v589 = vunpack.c.h.b16 %v496
  %v590 = vunpack.c.l.b16 %v497
  %v591 = vunpack.c.h.b16 %v497
  %v592 = vunpack.c.l.b16 %v498
  %v593 = vunpack.c.h.b16 %v498
  %v594 = vunpack.c.l.b16 %v499
  %v595 = vunpack.c.h.b16 %v499
  %v596 = vunpack.c.l.b16 %v500
  %v597 = vunpack.c.h.b16 %v500
  %v598 = vunpack.c.l.b16 %v501
  %v599 = vunpack.c.h.b16 %v501
  %v600 = vunpack.c.l.b16 %v502
  %v601 = vunpack.c.h.b16 %v502
  %v602 = vunpack.c.l.b16 %v503
  %v603 = vunpack.c.h.b16 %v503
  %v604 = vunpack.c.l.b16 %v504
  %v605 = vunpack.c.h.b16 %v504
  %v606 = vunpack.c.l.b16 %v505
  %v607 = vunpack.c.h.b16 %v505
  %v608 = vunpack.c.l.b16 %v506
  %v609 = vunpack.c.h.b16 %v506
  %v610 = vunpack.c.l.b16 %v507
  %v611 = vunpack.c.h.b16 %v507
  %v612 = vunpack.c.l.b16 %v508
  %v613 = vunpack.c.h.b16 %v508
  %v614 = vunpack.c.l.b16 %v509
  %v615 = vunpack.c.h.b16 %v509
  %v616 = vunpack.c.l.b16 %v510
  %v617 = vunpack.c.h.b16 %v510
  %v618 = vunpack.c.l.b16 %v511
  %v619 = vunpack.c.h.b16 %v511
  %v620 = vpack.c.b16 %v558, %v556
  %v621 = vpack.c.b16 %v559, %v557
  %v622 = vpack.c.b16 %v562, %v560
  %v623 = vpack.c.b16 %v563, %v561
  %v624 = vpack.c.b16 %v566, %v564
  %v625 = vpack.c.b16 %v567, %v565
  %v626 = vpack.c.b16 %v570, %v568
  %v627 = vpack.c.b16 %v571, %v569
  %v628 = vpack.c.b16 %v574, %v572
  %v629 = vpack.c.b16 %v575, %v573
  %v630 = vpack.c.b16 %v578, %v576
  %v631 = vpack.c.b16 %v579, %v577
  %v632 = vpack.c.b16 %v582, %v580
  %v633 = vpack.c.b16 %v583, %v581
  %v634 = vpack.c.b16 %v586, %v584
  %v635 = vpack.c.b16 %v587, %v585
  %v636 = vpack.c.b16 %v590, %v588
  %v637 = vpack.c.b16 %v591, %v589
  %v638 = vpack.c.b16 %v594, %v592
  %v639 = vpack.c.b16 %v595, %v593
  %v640 = vpack.c.b16 %v598, %v596
  %v641 = vpack.c.b16 %v599, %v597
  %v642 = vpack.c.b16 %v602, %v600
  %v643 = vpack.c.b16 %v603, %v601
  %v644 = vpack.c.b16 %v606, %v604
  %v645 = vpack.c.b16 %v607, %v605
  %v646 = vpack.c.b16 %v610, %v608
  %v647 = vpack.c.b16 %v611, %v609
  %v648 = vpack.c.b16 %v614, %v612
  %v649 = vpack.c.b16 %v615, %v613
  %v650 = vpack.c.b16 %v618, %v616
  %v651 = vpack.c.b16 %v619, %v617
  %684 = vmatprep.subr.bf16.mxu0 %v621
  %685 = vmatpush1.bf16.msra.mxu0 %v620
  %686 = vmatprep.subr.bf16.mxu0 %v623
  %687 = vmatpush1.bf16.msra.mxu0 %v622
  %688 = vmatprep.subr.bf16.mxu0 %v625
  %689 = vmatpush1.bf16.msra.mxu0 %v624
  %690 = vmatprep.subr.bf16.mxu0 %v627
  %691 = vmatpush1.bf16.msra.mxu0 %v626
  %692 = vmatprep.subr.bf16.mxu0 %v629
  %693 = vmatpush1.bf16.msra.mxu0 %v628
  %694 = vmatprep.subr.bf16.mxu0 %v631
  %695 = vmatpush1.bf16.msra.mxu0 %v630
  %696 = vmatprep.subr.bf16.mxu0 %v633
  %697 = vmatpush1.bf16.msra.mxu0 %v632
  %698 = vmatprep.subr.bf16.mxu0 %v635
  %699 = vmatpush1.bf16.msra.mxu0 %v634
  %700 = vmatprep.subr.bf16.mxu0 %v637
  %701 = vmatpush1.bf16.msra.mxu0 %v636
  %702 = vmatprep.subr.bf16.mxu0 %v639
  %703 = vmatpush1.bf16.msra.mxu0 %v638
  %704 = vmatprep.subr.bf16.mxu0 %v641
  %705 = vmatpush1.bf16.msra.mxu0 %v640
  %706 = vmatprep.subr.bf16.mxu0 %v643
  %707 = vmatpush1.bf16.msra.mxu0 %v642
  %708 = vmatprep.subr.bf16.mxu0 %v645
  %709 = vmatpush1.bf16.msra.mxu0 %v644
  %710 = vmatprep.subr.bf16.mxu0 %v647
  %711 = vmatpush1.bf16.msra.mxu0 %v646
  %712 = vmatprep.subr.bf16.mxu0 %v649
  %713 = vmatpush1.bf16.msra.mxu0 %v648
  %714 = vmatprep.subr.bf16.mxu0 %v651
  %715 = vmatpush1.bf16.msra.mxu0 %v650
  %716 = vmatprep.mubr.bf16.mxu0 %v465
  %717 = vmatmul.mubr.bf16.gmra.mrb[0].mxu0 %v464
  %v718 = vpop.f32.mrb[0].mxu0
  %v719 = vadd.f32 %v517, %v718
  %v720 = vpop.f32.mrb[0].mxu0
  %v721 = vadd.f32 %v521, %v720
  %v722 = vpop.f32.mrb[0].mxu0
  %v723 = vadd.f32 %v517, %v722
  %v724 = vpop.f32.mrb[0].mxu0
  %v725 = vadd.f32 %v521, %v724
  %726 = vmatprep.mubr.bf16.mxu0 %v467
  %727 = vmatmul.mubr.bf16.gmra.mrb[0].mxu0 %v466
  %v728 = vpop.f32.mrb[0].mxu0
  %v729 = vadd.f32 %v517, %v728
  %v730 = vpop.f32.mrb[0].mxu0
  %v731 = vadd.f32 %v521, %v730
  %v732 = vpop.f32.mrb[0].mxu0
  %v733 = vadd.f32 %v517, %v732
  %v734 = vpop.f32.mrb[0].mxu0
  %v735 = vadd.f32 %v521, %v734
  %736 = vmatprep.mubr.bf16.mxu0 %v469
  %737 = vmatmul.mubr.bf16.gmra.mrb[0].mxu0 %v468
  %v738 = vpop.f32.mrb[0].mxu0
  %v739 = vadd.f32 %v517, %v738
  %v740 = vpop.f32.mrb[0].mxu0
  %v741 = vadd.f32 %v521, %v740
  %v742 = vpop.f32.mrb[0].mxu0
  %v743 = vadd.f32 %v517, %v742
  %v744 = vpop.f32.mrb[0].mxu0
  %v745 = vadd.f32 %v521, %v744
  %746 = vmatprep.mubr.bf16.mxu0 %v471
  %747 = vmatmul.mubr.bf16.gmra.mrb[0].mxu0 %v470
  %v748 = vpop.f32.mrb[0].mxu0
  %v749 = vadd.f32 %v517, %v748
  %v750 = vpop.f32.mrb[0].mxu0
  %v751 = vadd.f32 %v521, %v750
  %v752 = vpop.f32.mrb[0].mxu0
  %v753 = vadd.f32 %v517, %v752
  %v754 = vpop.f32.mrb[0].mxu0
  %v755 = vadd.f32 %v521, %v754
  %756 = vmatprep.mubr.bf16.mxu0 %v473
  %757 = vmatmul.mubr.bf16.gmra.mrb[0].mxu0 %v472
  %v758 = vpop.f32.mrb[0].mxu0
  %v759 = vadd.f32 %v517, %v758
  %v760 = vpop.f32.mrb[0].mxu0
  %v761 = vadd.f32 %v521, %v760
  %v762 = vpop.f32.mrb[0].mxu0
  %v763 = vadd.f32 %v517, %v762
  %v764 = vpop.f32.mrb[0].mxu0
  %v765 = vadd.f32 %v521, %v764
  %766 = vmatprep.mubr.bf16.mxu0 %v475
  %767 = vmatmul.mubr.bf16.gmra.mrb[0].mxu0 %v474
  %v768 = vpop.f32.mrb[0].mxu0
  %v769 = vadd.f32 %v517, %v768
  %v770 = vpop.f32.mrb[0].mxu0
  %v771 = vadd.f32 %v521, %v770
  %v772 = vpop.f32.mrb[0].mxu0
  %v773 = vadd.f32 %v517, %v772
  %v774 = vpop.f32.mrb[0].mxu0
  %v775 = vadd.f32 %v521, %v774
  %776 = vmatprep.mubr.bf16.mxu0 %v477
  %777 = vmatmul.mubr.bf16.gmra.mrb[0].mxu0 %v476
  %v778 = vpop.f32.mrb[0].mxu0
  %v779 = vadd.f32 %v517, %v778
  %v780 = vpop.f32.mrb[0].mxu0
  %v781 = vadd.f32 %v521, %v780
  %v782 = vpop.f32.mrb[0].mxu0
  %v783 = vadd.f32 %v517, %v782
  %v784 = vpop.f32.mrb[0].mxu0
  %v785 = vadd.f32 %v521, %v784
  %786 = vmatprep.mubr.bf16.mxu0 %v479
  %787 = vmatmul.mubr.bf16.gmra.mrb[0].mxu0 %v478
  %v788 = vpop.f32.mrb[0].mxu0
  %v789 = vadd.f32 %v517, %v788
  %v790 = vpop.f32.mrb[0].mxu0
  %v791 = vadd.f32 %v521, %v790
  %v792 = vpop.f32.mrb[0].mxu0
  %v793 = vadd.f32 %v517, %v792
  %v794 = vpop.f32.mrb[0].mxu0
  %v795 = vadd.f32 %v521, %v794
  %796 = vdwg.mxu0
  %v797 = vmax.f32 %v719, 0.0
  %v798 = vmax.f32 %v721, 0.0
  %v799 = vmax.f32 %v723, 0.0
  %v800 = vmax.f32 %v725, 0.0
  %v801 = vmax.f32 %v729, 0.0
  %v802 = vmax.f32 %v731, 0.0
  %v803 = vmax.f32 %v733, 0.0
  %v804 = vmax.f32 %v735, 0.0
  %v805 = vmax.f32 %v739, 0.0
  %v806 = vmax.f32 %v741, 0.0
  %v807 = vmax.f32 %v743, 0.0
  %v808 = vmax.f32 %v745, 0.0
  %v809 = vmax.f32 %v749, 0.0
  %v810 = vmax.f32 %v751, 0.0
  %v811 = vmax.f32 %v753, 0.0
  %v812 = vmax.f32 %v755, 0.0
  %v813 = vmax.f32 %v759, 0.0
  %v814 = vmax.f32 %v761, 0.0
  %v815 = vmax.f32 %v763, 0.0
  %v816 = vmax.f32 %v765, 0.0
  %v817 = vmax.f32 %v769, 0.0
  %v818 = vmax.f32 %v771, 0.0
  %v819 = vmax.f32 %v773, 0.0
  %v820 = vmax.f32 %v775, 0.0
  %v821 = vmax.f32 %v779, 0.0
  %v822 = vmax.f32 %v781, 0.0
  %v823 = vmax.f32 %v783, 0.0
  %v824 = vmax.f32 %v785, 0.0
  %v825 = vmax.f32 %v789, 0.0
  %v826 = vmax.f32 %v791, 0.0
  %v827 = vmax.f32 %v793, 0.0
  %v828 = vmax.f32 %v795, 0.0
  %v829 = vld [vmem:[%s7] sm:$0x3]
  %v831 = vlaneseq
  %v832 = vshrl.u32 %v831, 7
  %v833 = vsub.s32 0, %v832
  %v834 = vrot.slane %v829, %v833
  %v835 = vlaneseq
  %v836 = vshrl.u32 %v835, 7
  %v837 = vsub.s32 1, %v836
  %v838 = vrot.slane %v829, %v837
  %v841 = vmul.f32 %v797, %v834
  %v842 = vmul.f32 %v798, %v838
  %v843 = vmul.f32 %v799, %v834
  %v844 = vmul.f32 %v800, %v838
  %v845 = vmul.f32 %v801, %v834
  %v846 = vmul.f32 %v802, %v838
  %v847 = vmul.f32 %v803, %v834
  %v848 = vmul.f32 %v804, %v838
  %v849 = vmul.f32 %v805, %v834
  %v850 = vmul.f32 %v806, %v838
  %v851 = vmul.f32 %v807, %v834
  %v852 = vmul.f32 %v808, %v838
  %v853 = vmul.f32 %v809, %v834
  %v854 = vmul.f32 %v810, %v838
  %v855 = vmul.f32 %v811, %v834
  %v856 = vmul.f32 %v812, %v838
  %v857 = vmul.f32 %v813, %v834
  %v858 = vmul.f32 %v814, %v838
  %v859 = vmul.f32 %v815, %v834
  %v860 = vmul.f32 %v816, %v838
  %v861 = vmul.f32 %v817, %v834
  %v862 = vmul.f32 %v818, %v838
  %v863 = vmul.f32 %v819, %v834
  %v864 = vmul.f32 %v820, %v838
  %v865 = vmul.f32 %v821, %v834
  %v866 = vmul.f32 %v822, %v838
  %v867 = vmul.f32 %v823, %v834
  %v868 = vmul.f32 %v824, %v838
  %v869 = vmul.f32 %v825, %v834
  %v870 = vmul.f32 %v826, %v838
  %v871 = vmul.f32 %v827, %v834
  %v872 = vmul.f32 %v828, %v838
  %v873 = vadd.f32 %v841, %v842
  %874 = vadd.xlane.f32.xlu0 %v873
  %v875 = vpop.xlane.xlu0 %874
  %v876 = vadd.f32 %v843, %v844
  %877 = vadd.xlane.f32.xlu0 %v876
  %v878 = vpop.xlane.xlu0 %877
  %v879 = vadd.f32 %v845, %v846
  %880 = vadd.xlane.f32.xlu0 %v879
  %v881 = vpop.xlane.xlu0 %880
  %v882 = vadd.f32 %v847, %v848
  %883 = vadd.xlane.f32.xlu0 %v882
  %v884 = vpop.xlane.xlu0 %883
  %v885 = vadd.f32 %v849, %v850
  %886 = vadd.xlane.f32.xlu0 %v885
  %v887 = vpop.xlane.xlu0 %886
  %v888 = vadd.f32 %v851, %v852
  %889 = vadd.xlane.f32.xlu0 %v888
  %v890 = vpop.xlane.xlu0 %889
  %v891 = vadd.f32 %v853, %v854
  %892 = vadd.xlane.f32.xlu0 %v891
  %v893 = vpop.xlane.xlu0 %892
  %v894 = vadd.f32 %v855, %v856
  %895 = vadd.xlane.f32.xlu0 %v894
  %v896 = vpop.xlane.xlu0 %895
  %v897 = vadd.f32 %v857, %v858
  %898 = vadd.xlane.f32.xlu0 %v897
  %v899 = vpop.xlane.xlu0 %898
  %v900 = vadd.f32 %v859, %v860
  %901 = vadd.xlane.f32.xlu0 %v900
  %v902 = vpop.xlane.xlu0 %901
  %v903 = vadd.f32 %v861, %v862
  %904 = vadd.xlane.f32.xlu0 %v903
  %v905 = vpop.xlane.xlu0 %904
  %v906 = vadd.f32 %v863, %v864
  %907 = vadd.xlane.f32.xlu0 %v906
  %v908 = vpop.xlane.xlu0 %907
  %v909 = vadd.f32 %v865, %v866
  %910 = vadd.xlane.f32.xlu0 %v909
  %v911 = vpop.xlane.xlu0 %910
  %v912 = vadd.f32 %v867, %v868
  %913 = vadd.xlane.f32.xlu0 %v912
  %v914 = vpop.xlane.xlu0 %913
  %v915 = vadd.f32 %v869, %v870
  %916 = vadd.xlane.f32.xlu0 %v915
  %v917 = vpop.xlane.xlu0 %916
  %v918 = vadd.f32 %v871, %v872
  %919 = vadd.xlane.f32.xlu0 %v918
  %v920 = vpop.xlane.xlu0 %919
  %s921 = sld [smem:[#allocation2]]
  %v922 = vstv %s921
  %v923 = vadd.f32 %v875, %v922
  %v924 = vadd.f32 %v878, %v922
  %v925 = vadd.f32 %v881, %v922
  %v926 = vadd.f32 %v884, %v922
  %v927 = vadd.f32 %v887, %v922
  %v928 = vadd.f32 %v890, %v922
  %v929 = vadd.f32 %v893, %v922
  %v930 = vadd.f32 %v896, %v922
  %v931 = vadd.f32 %v899, %v922
  %v932 = vadd.f32 %v902, %v922
  %v933 = vadd.f32 %v905, %v922
  %v934 = vadd.f32 %v908, %v922
  %v935 = vadd.f32 %v911, %v922
  %v936 = vadd.f32 %v914, %v922
  %v937 = vadd.f32 %v917, %v922
  %v938 = vadd.f32 %v920, %v922
  %v955 = vlaneseq
  %v956 = vand.u32 %v955, 127
  %v957 = vlaneseq
  %v958 = vshrl.u32 %v957, 7
  %v959 = vsub.s32 %v956, %v958
  %v960 = vrot.slane %v923, %v959
  %v961 = vadd.s32 %v956, 4294967288
  %v962 = vlaneseq
  %v963 = vshrl.u32 %v962, 7
  %v964 = vsub.s32 %v961, %v963
  %v965 = vrot.slane %v924, %v964
  %vm966 = vcmask 130112
  %v967 = vsel %vm966, %v965, %v960
  %v968 = vadd.s32 %v956, 4294967280
  %v969 = vlaneseq
  %v970 = vshrl.u32 %v969, 7
  %v971 = vsub.s32 %v968, %v970
  %v972 = vrot.slane %v925, %v971
  %vm973 = vcmask 195712
  %v974 = vsel %vm973, %v972, %v967
  %v975 = vadd.s32 %v956, 4294967272
  %v976 = vlaneseq
  %v977 = vshrl.u32 %v976, 7
  %v978 = vsub.s32 %v975, %v977
  %v979 = vrot.slane %v926, %v978
  %vm980 = vcmask 261312
  %v981 = vsel %vm980, %v979, %v974
  %v982 = vadd.s32 %v956, 4294967264
  %v983 = vlaneseq
  %v984 = vshrl.u32 %v983, 7
  %v985 = vsub.s32 %v982, %v984
  %v986 = vrot.slane %v927, %v985
  %vm987 = vcmask 326912
  %v988 = vsel %vm987, %v986, %v981
  %v989 = vadd.s32 %v956, 4294967256
  %v990 = vlaneseq
  %v991 = vshrl.u32 %v990, 7
  %v992 = vsub.s32 %v989, %v991
  %v993 = vrot.slane %v928, %v992
  %vm994 = vcmask 392512
  %v995 = vsel %vm994, %v993, %v988
  %v996 = vadd.s32 %v956, 4294967248
  %v997 = vlaneseq
  %v998 = vshrl.u32 %v997, 7
  %v999 = vsub.s32 %v996, %v998
  %v1000 = vrot.slane %v929, %v999
  %vm1001 = vcmask 458112
  %v1002 = vsel %vm1001, %v1000, %v995
  %v1003 = vadd.s32 %v956, 4294967240
  %v1004 = vlaneseq
  %v1005 = vshrl.u32 %v1004, 7
  %v1006 = vsub.s32 %v1003, %v1005
  %v1007 = vrot.slane %v930, %v1006
  %vm1008 = vcmask 523712
  %v1009 = vsel %vm1008, %v1007, %v1002
  %v1010 = vadd.s32 %v956, 4294967232
  %v1011 = vlaneseq
  %v1012 = vshrl.u32 %v1011, 7
  %v1013 = vsub.s32 %v1010, %v1012
  %v1014 = vrot.slane %v931, %v1013
  %vm1015 = vcmask 589312
  %v1016 = vsel %vm1015, %v1014, %v1009
  %v1017 = vadd.s32 %v956, 4294967224
  %v1018 = vlaneseq
  %v1019 = vshrl.u32 %v1018, 7
  %v1020 = vsub.s32 %v1017, %v1019
  %v1021 = vrot.slane %v932, %v1020
  %vm1022 = vcmask 654912
  %v1023 = vsel %vm1022, %v1021, %v1016
  %v1024 = vadd.s32 %v956, 4294967216
  %v1025 = vlaneseq
  %v1026 = vshrl.u32 %v1025, 7
  %v1027 = vsub.s32 %v1024, %v1026
  %v1028 = vrot.slane %v933, %v1027
  %vm1029 = vcmask 720512
  %v1030 = vsel %vm1029, %v1028, %v1023
  %v1031 = vadd.s32 %v956, 4294967208
  %v1032 = vlaneseq
  %v1033 = vshrl.u32 %v1032, 7
  %v1034 = vsub.s32 %v1031, %v1033
  %v1035 = vrot.slane %v934, %v1034
  %vm1036 = vcmask 786112
  %v1037 = vsel %vm1036, %v1035, %v1030
  %v1038 = vadd.s32 %v956, 4294967200
  %v1039 = vlaneseq
  %v1040 = vshrl.u32 %v1039, 7
  %v1041 = vsub.s32 %v1038, %v1040
  %v1042 = vrot.slane %v935, %v1041
  %vm1043 = vcmask 851712
  %v1044 = vsel %vm1043, %v1042, %v1037
  %v1045 = vadd.s32 %v956, 4294967192
  %v1046 = vlaneseq
  %v1047 = vshrl.u32 %v1046, 7
  %v1048 = vsub.s32 %v1045, %v1047
  %v1049 = vrot.slane %v936, %v1048
  %vm1050 = vcmask 917312
  %v1051 = vsel %vm1050, %v1049, %v1044
  %v1052 = vadd.s32 %v956, 4294967184
  %v1053 = vlaneseq
  %v1054 = vshrl.u32 %v1053, 7
  %v1055 = vsub.s32 %v1052, %v1054
  %v1056 = vrot.slane %v937, %v1055
  %vm1057 = vcmask 982912
  %v1058 = vsel %vm1057, %v1056, %v1051
  %v1059 = vadd.s32 %v956, 4294967176
  %v1060 = vlaneseq
  %v1061 = vshrl.u32 %v1060, 7
  %v1062 = vsub.s32 %v1059, %v1061
  %v1063 = vrot.slane %v938, %v1062
  %vm1064 = vcmask 1048512
  %v1065 = vsel %vm1064, %v1063, %v1058
  %1067 = vst [vmem:[%s9] sm:$0x1] %v1065
  // Predicated region
  $region38: #{qnetwork_forward.1} parent=0 // pred_check
    _
  $region39: #{qnetwork_forward.1} parent=0 // pred_check_branch
    %1069 = sbr.rel (0) target = $region41
  $region40: #{qnetwork_forward.1} parent=0 // pred_region
    _
  $region41: #{qnetwork_forward.1} parent=0 // pred_fallthru
    _
  // Predicated region
  $region42: #{qnetwork_forward.1} parent=0 // pred_check
    _
  $region43: #{qnetwork_forward.1} parent=0 // pred_check_branch
    %1071 = sbr.rel (0) target = $region45
  $region44: #{qnetwork_forward.1} parent=0 // pred_region
    _
  $region45: #{qnetwork_forward.1} parent=0 // pred_fallthru
    _

</llo_original>
